<compile_context>
chip_gen: v7x
topology: tpu7x:2x2x1
jax: 0.10.0
libtpu: 0.0.40
codegen_flags: <defaults>
</compile_context>

<pallas_src>
import jax
import jax.numpy as jnp
from jax.experimental import pallas as pl
from jax.experimental.pallas import tpu as pltpu


def sigmoid_mul_kernel(gate_ref, x_ref, o_ref):
    # gate_ref: (row_tile, 1), x_ref/o_ref: (row_tile, HW)
    s = jax.nn.sigmoid(gate_ref[...])      # exp -> EUP slot (free under mem-bound)
    o_ref[...] = s * x_ref[...]            # broadcast over lanes (spatial)


def _pick_row_blocks(R, HW, dtype):
    """Size-aware block count.

    Keeps per-block bytes near the measured 512 KB - 2 MB sweet spot, never
    over-splits tiny tensors (>=2 only to engage both v7x TensorCores), and
    keeps row_tile a multiple of the dtype's sublane packing so the BlockSpec
    stays legal for f32/bf16/int8 alike.  Falls back to a single full-extent
    block (always legal) when R can't be split cleanly.
    """
    itemsize = jnp.dtype(dtype).itemsize
    sublane = {4: 8, 2: 16, 1: 32}.get(itemsize, 8)
    total_bytes = R * HW * itemsize
    # Target block count: ~2 MB per block, but at least 2 (dual-TC on v7x).
    target = max(2, pl.cdiv(total_bytes, 2 * 1024 * 1024))
    # Largest n <= target that divides R into sublane-aligned tiles.
    for n in range(target, 1, -1):
        if R % n == 0 and (R // n) % sublane == 0:
            return n, R // n
    return 1, R  # full-extent block; v7x dual-TC split is dropped in this case


def sigmoid_mul(x191, x187):
    """x191: (N, C, 1, 1) gate, x187: (N, C, H, W). Returns sigmoid(x191) * x187."""
    N, C, H, W = x187.shape
    assert x191.shape == (N, C, 1, 1)
    R = N * C          # fold batch into the channel/sublane axis -> N-general
    HW = H * W

    # Pure reshapes (no transposes) -- XLA will not materialize copies.
    x2d = x187.reshape(R, HW)
    g2d = x191.reshape(R, 1).astype(x187.dtype)

    n_blocks, row_tile = _pick_row_blocks(R, HW, x187.dtype)

    out2d = pl.pallas_call(
        sigmoid_mul_kernel,
        out_shape=jax.ShapeDtypeStruct((R, HW), x187.dtype),
        grid=(n_blocks,),
        in_specs=[
            pl.BlockSpec((row_tile, 1), lambda i: (i, 0)),
            pl.BlockSpec((row_tile, HW), lambda i: (i, 0)),
        ],
        out_specs=pl.BlockSpec((row_tile, HW), lambda i: (i, 0)),
        compiler_params=pltpu.CompilerParams(
            # One grid step per TensorCore on v7x when n_blocks == 2;
            # harmless (near-zero measured impact) on single-TC v5e/v6e.
            dimension_semantics=("parallel",),
        ),
    )(g2d, x2d)

    # Pure reshape back to NCHW.
    return out2d.reshape(N, C, H, W)


if __name__ == "__main__":
    key = jax.random.PRNGKey(0)
    k1, k2 = jax.random.split(key)
    # Shapes match the PyTorch module's forward exactly (already small).
    x187 = jax.random.normal(k1, (1, 672, 14, 14), dtype=jnp.float32)
    x191 = jax.random.normal(k2, (1, 672, 1, 1), dtype=jnp.float32)

    out = sigmoid_mul(x191, x187)
    out = jax.block_until_ready(out)

    # Reference check in plain JAX.
    ref = jax.nn.sigmoid(x191) * x187
    assert out.shape == (1, 672, 14, 14)
    assert jnp.allclose(out, ref, atol=1e-6, rtol=1e-6)

    print("KERNEL_OK")
</pallas_src>

<mosaic_0001>
module attributes {stable_mosaic.version = 11 : i64} {
  func.func @sigmoid_mul_kernel(%arg0: i32, %arg1: memref<336x1xf32, #tpu.memory_space<vmem>>, %arg2: memref<336x196xf32, #tpu.memory_space<vmem>>, %arg3: memref<336x196xf32, #tpu.memory_space<vmem>>) attributes {dimension_semantics = [#tpu.dimension_semantics<parallel>], iteration_bounds = array<i64: 2>, scalar_prefetch = 0 : i64, scratch_operands = 0 : i64, tpu.core_type = #tpu.core_type<tc>, window_params = [{transform_indices = @transform_0, window_bounds = array<i64: 336, 1>}, {transform_indices = @transform_1, window_bounds = array<i64: 336, 196>}, {transform_indices = @transform_2, window_bounds = array<i64: 336, 196>}]} {
    %c0 = arith.constant 0 : index
    %c0_0 = arith.constant 0 : index
    %0 = vector.load %arg1[%c0, %c0_0] : memref<336x1xf32, #tpu.memory_space<vmem>>, vector<336x1xf32>
    %1 = arith.negf %0 : vector<336x1xf32>
    %2 = math.exp %1 : vector<336x1xf32>
    %cst = arith.constant 1.000000e+00 : f32
    %3 = vector.broadcast %cst : f32 to vector<336x1xf32>
    %4 = arith.addf %3, %2 : vector<336x1xf32>
    %5 = arith.divf %3, %4 : vector<336x1xf32>
    %c0_1 = arith.constant 0 : index
    %c0_2 = arith.constant 0 : index
    %6 = vector.load %arg2[%c0_1, %c0_2] : memref<336x196xf32, #tpu.memory_space<vmem>>, vector<336x196xf32>
    %7 = vector.broadcast %5 : vector<336x1xf32> to vector<336x196xf32>
    %8 = arith.mulf %7, %6 : vector<336x196xf32>
    %c0_3 = arith.constant 0 : index
    %c0_4 = arith.constant 0 : index
    %9 = vector.load %arg3[%c0_3, %c0_4] : memref<336x196xf32, #tpu.memory_space<vmem>>, vector<336x196xf32>
    tpu.vector_store %arg3[%c0_3, %c0_4], %8 {strides = array<i32>} : memref<336x196xf32, #tpu.memory_space<vmem>>, vector<336x196xf32>,
    return
  }
  func.func @transform_0(%arg0: i32) -> (i32, i32) {
    %c0_i32 = arith.constant 0 : i32
    %c0_i32_0 = arith.constant 0 : i32
    return %arg0, %c0_i32 : i32, i32
  }
  func.func @transform_1(%arg0: i32) -> (i32, i32) {
    %c0_i32 = arith.constant 0 : i32
    %c0_i32_0 = arith.constant 0 : i32
    return %arg0, %c0_i32 : i32, i32
  }
  func.func @transform_2(%arg0: i32) -> (i32, i32) {
    %c0_i32 = arith.constant 0 : i32
    %c0_i32_0 = arith.constant 0 : i32
    return %arg0, %c0_i32 : i32, i32
  }
}

</mosaic_0001>

<llo_original>
// kernel: tpu_custom_call.1
$region0: #{tpu_custom_call.1}
  #allocation0 [shape = 'u32[]', space=smem, size = 0x4, offset = 0x4, fixed_abs, tag = 'smem constant byte address 0x4 - core index']
  #allocation1 [shape = 'u32[144,128]{1,0:T(1,128)}', space=vmem, size = 0x12000, scoped, tag = 'internal scratch']
  %s0 = inlined_call_operand.vmem [shape: f32[672,1], index: 0, kind: input, shape index: {}]
  %s1 = inlined_call_operand.vmem [shape: f32[672,196], index: 1, kind: input, shape index: {}]
  %s2 = inlined_call_operand.vmem [shape: f32[672,196], index: 2, kind: output, shape index: {}]
  %s3 = sld [smem:[#allocation0]]
  $region41: #{tpu_custom_call.1} parent=0
    _
  %s5 = ssub.s32 1, %s3
  %s6 = scalar_select 0, %s5, %s3
  loop: start=0, step=1, limit=4
  $region2: #{tpu_custom_call.1} parent=0 // loop_pre_header
    _
  $region3: #{tpu_custom_call.1} parent=0 // loop_header
    %s8 = sphi 0, %s12
    %p9 = scmp.ge.s32.totalorder %s8, 4
    %s18 = sphi 0, %s20
    %s21 = sphi 0, %s18
    %s22 = sphi 0, %s21
    %s38 = sphi 0, %s22
    %s44 = sphi 0, %s46
    %s47 = sphi 0, %s44
    %s48 = sphi 0, %s47
    %s64 = sphi 0, %s48
    %s70 = sphi 0, %s72
    %s73 = sphi 0, %s70
    %s74 = sphi 0, %s73
    %s90 = sphi 0, %s74
  $region4: #{tpu_custom_call.1} parent=0 // loop_header_branch
    %11 = sbr.rel (%p9) target = $region8
  $region5: #{tpu_custom_call.1} parent=0 // loop_body
    %s13 = ssub.s32 %s8, 1
    %s14 = ssub.s32 %s8, 2
    %s15 = sadd.s32 %s8, 1
    %s16 = ssub.s32 %s8, %s15
    %p17 = scmp.eq.s32.totalorder %s16, 0
    %s19 = sadd.s32 %s18, 1
    %s20 = scalar_select %p17, %s18, %s19
    %p23 = pneg %p17
    %p24 = scmp.eq.s32.totalorder %s8, 1
    %p25 = por %p23, %p24
    %p26 = scmp.ne.s32.totalorder %s18, %s21
    %p27 = scmp.eq.s32.totalorder %s8, 0
    %p28 = por %p26, %p27
    %p29 = scmp.ne.s32.totalorder %s18, %s21
    %p30 = scmp.eq.s32.totalorder %s13, 1
    %p31 = por %p29, %p30
    %p32 = scmp.ne.s32.totalorder %s21, %s22
    %p33 = scmp.eq.s32.totalorder %s13, 0
    %p34 = por %p32, %p33
    %p35 = scmp.ne.s32.totalorder %s21, %s22
    %p36 = scmp.eq.s32.totalorder %s14, 1
    %p37 = por %p35, %p36
    %p39 = scmp.ne.s32.totalorder %s22, %s38
    %p40 = scmp.eq.s32.totalorder %s14, 0
    %p41 = por %p39, %p40
    %s42 = ssub.s32 %s8, %s15
    %p43 = scmp.eq.s32.totalorder %s42, 0
    %s45 = sadd.s32 %s44, 1
    %s46 = scalar_select %p43, %s44, %s45
    %p49 = pneg %p43
    %p50 = scmp.eq.s32.totalorder %s8, 1
    %p51 = por %p49, %p50
    %p52 = scmp.ne.s32.totalorder %s44, %s47
    %p53 = scmp.eq.s32.totalorder %s8, 0
    %p54 = por %p52, %p53
    %p55 = scmp.ne.s32.totalorder %s44, %s47
    %p56 = scmp.eq.s32.totalorder %s13, 1
    %p57 = por %p55, %p56
    %p58 = scmp.ne.s32.totalorder %s47, %s48
    %p59 = scmp.eq.s32.totalorder %s13, 0
    %p60 = por %p58, %p59
    %p61 = scmp.ne.s32.totalorder %s47, %s48
    %p62 = scmp.eq.s32.totalorder %s14, 1
    %p63 = por %p61, %p62
    %p65 = scmp.ne.s32.totalorder %s48, %s64
    %p66 = scmp.eq.s32.totalorder %s14, 0
    %p67 = por %p65, %p66
    %s68 = ssub.s32 %s8, %s15
    %p69 = scmp.eq.s32.totalorder %s68, 0
    %s71 = sadd.s32 %s70, 1
    %s72 = scalar_select %p69, %s70, %s71
    %p75 = pneg %p69
    %p76 = scmp.eq.s32.totalorder %s8, 1
    %p77 = por %p75, %p76
    %p78 = scmp.ne.s32.totalorder %s70, %s73
    %p79 = scmp.eq.s32.totalorder %s8, 0
    %p80 = por %p78, %p79
    %p81 = scmp.ne.s32.totalorder %s70, %s73
    %p82 = scmp.eq.s32.totalorder %s13, 1
    %p83 = por %p81, %p82
    %p84 = scmp.ne.s32.totalorder %s73, %s74
    %p85 = scmp.eq.s32.totalorder %s13, 0
    %p86 = por %p84, %p85
    %p87 = scmp.ne.s32.totalorder %s73, %s74
    %p88 = scmp.eq.s32.totalorder %s14, 1
    %p89 = por %p87, %p88
    %p91 = scmp.ne.s32.totalorder %s74, %s90
    %p92 = scmp.eq.s32.totalorder %s14, 0
    %p93 = por %p91, %p92
    %p94 = scmp.le.s32.totalorder 1, %s8
    %p95 = scmp.lt.s32.totalorder %s8, 3
    %p96 = pnand %p94, %p95
    %p97 = pneg %p96
    // Predicated region
    $region9: #{tpu_custom_call.1} parent=5 // pred_check
      _
    $region10: #{tpu_custom_call.1} parent=5 // pred_check_branch
      %99 = sbr.rel (%p96) target = $region12
    $region11: #{tpu_custom_call.1} parent=5 // pred_region
      %s100 = ssub.s32 %s8, 1
    $region12: #{tpu_custom_call.1} parent=5 // pred_fallthru
      _
    %p101 = scmp.lt.s32.totalorder %s8, 2
    // Predicated region
    $region13: #{tpu_custom_call.1} parent=5 // pred_check
      %p102 = pneg %p101
    $region14: #{tpu_custom_call.1} parent=5 // pred_check_branch
      %104 = sbr.rel (%p102) target = $region16
    $region15: #{tpu_custom_call.1} parent=5 // pred_region
      // Predicated region
      $region17: #{tpu_custom_call.1} parent=15 // pred_check
        %p105 = pneg %p28
      $region18: #{tpu_custom_call.1} parent=15 // pred_check_branch
        %107 = sbr.rel (%p105) target = $region20
      $region19: #{tpu_custom_call.1} parent=15 // pred_region
        %s108 = smul.u32 42, %s8
        %p109 = scmp.lt.s32.totalorder %s108, 83
        %s110 = scalar_select %p109, %s108, 83
        %s111 = smul.addr %s110, 8
        %s112 = scalar_lea.vmem %s0, %s111
        %s113 = smul.u32 42, %s8
      $region20: #{tpu_custom_call.1} parent=15 // pred_fallthru
        _
      // Predicated region
      $region21: #{tpu_custom_call.1} parent=15 // pred_check
        %p114 = pneg %p54
      $region22: #{tpu_custom_call.1} parent=15 // pred_check_branch
        %116 = sbr.rel (%p114) target = $region24
      $region23: #{tpu_custom_call.1} parent=15 // pred_region
        %s117 = smul.u32 42, %s8
        %p118 = scmp.lt.s32.totalorder %s117, 83
        %s119 = scalar_select %p118, %s117, 83
        %s120 = smul.addr %s119, 2
        %s121 = smul.addr %s120, 8
        %s122 = scalar_lea.vmem %s1, %s121
        %s123 = smul.u32 42, %s8
      $region24: #{tpu_custom_call.1} parent=15 // pred_fallthru
        _
    $region16: #{tpu_custom_call.1} parent=5 // pred_fallthru
      _
    %p124 = scmp.le.s32.totalorder 1, %s8
    %p125 = scmp.lt.s32.totalorder %s8, 3
    %p126 = pnand %p124, %p125
    %p127 = pneg %p126
    // Predicated region
    $region25: #{tpu_custom_call.1} parent=5 // pred_check
      _
    $region26: #{tpu_custom_call.1} parent=5 // pred_check_branch
      %129 = sbr.rel (%p126) target = $region28
    $region27: #{tpu_custom_call.1} parent=5 // pred_region
      %s130 = ssub.s32 %s8, 1
      %s131 = smul.u32 42, %s13
      %p132 = scmp.lt.s32.totalorder %s131, 83
      %s133 = scalar_select %p132, %s131, 83
      %s134 = smul.addr %s133, 8
      %s135 = scalar_lea.vmem %s0, %s134
      %p136 = pneg %p34
      %p137 = pneg %p31
      %s138 = smul.u32 42, %s13
      %p139 = scmp.lt.s32.totalorder %s138, 83
      %s140 = scalar_select %p139, %s138, 83
      %s141 = smul.addr %s140, 2
      %s142 = smul.addr %s141, 8
      %s143 = scalar_lea.vmem %s1, %s142
      %p144 = pneg %p60
      %p145 = pneg %p57
      %p146 = pneg %p86
      %p147 = pneg %p83
      %s148 = smul.u32 42, %s13
      %p149 = scmp.lt.s32.totalorder %s148, 83
      %s150 = scalar_select %p149, %s148, 83
      %s151 = smul.addr %s150, 2
      %s152 = smul.addr %s151, 8
      %s153 = scalar_lea.vmem %s2, %s152
      %s154 = smul.u32 42, %s13
      %p155 = scmp.lt.s32.totalorder %s154, 83
      %s156 = scalar_select %p155, %s154, 83
      %s157 = smul.addr %s156, 8
      %s158 = scalar_lea.vmem %s0, %s157
      %s159 = smul.u32 42, %s13
      %s160 = smul.u32 42, %s13
      %p161 = scmp.lt.s32.totalorder %s160, 83
      %s162 = scalar_select %p161, %s160, 83
      %s163 = smul.addr %s162, 2
      %s164 = smul.addr %s163, 8
      %s165 = scalar_lea.vmem %s1, %s164
      %s166 = smul.u32 42, %s13
      %s167 = smul.u32 42, %s13
      %p168 = scmp.lt.s32.totalorder %s167, 83
      %s169 = scalar_select %p168, %s167, 83
      %s170 = smul.addr %s169, 2
      %s171 = smul.addr %s170, 8
      %s172 = scalar_lea.vmem %s2, %s171
      %s173 = smul.u32 42, %s13
      %v174 = vld [vmem:[%s158] sm:$0xff]
      %v175 = vld [vmem:[%s158 + $0x8] sm:$0xff]
      %v176 = vld [vmem:[%s158 + $0x10] sm:$0xff]
      %v177 = vld [vmem:[%s158 + $0x18] sm:$0xff]
      %v178 = vld [vmem:[%s158 + $0x20] sm:$0xff]
      %v179 = vld [vmem:[%s158 + $0x28] sm:$0xff]
      %v180 = vld [vmem:[%s158 + $0x30] sm:$0xff]
      %v181 = vld [vmem:[%s158 + $0x38] sm:$0xff]
      %v182 = vld [vmem:[%s158 + $0x40] sm:$0xff]
      %v183 = vld [vmem:[%s158 + $0x48] sm:$0xff]
      %v184 = vld [vmem:[%s158 + $0x50] sm:$0xff]
      %v185 = vld [vmem:[%s158 + $0x58] sm:$0xff]
      %v186 = vld [vmem:[%s158 + $0x60] sm:$0xff]
      %v187 = vld [vmem:[%s158 + $0x68] sm:$0xff]
      %v188 = vld [vmem:[%s158 + $0x70] sm:$0xff]
      %v189 = vld [vmem:[%s158 + $0x78] sm:$0xff]
      %v190 = vld [vmem:[%s158 + $0x80] sm:$0xff]
      %v191 = vld [vmem:[%s158 + $0x88] sm:$0xff]
      %v192 = vld [vmem:[%s158 + $0x90] sm:$0xff]
      %v193 = vld [vmem:[%s158 + $0x98] sm:$0xff]
      %v194 = vld [vmem:[%s158 + $0xa0] sm:$0xff]
      %v195 = vld [vmem:[%s158 + $0xa8] sm:$0xff]
      %v196 = vld [vmem:[%s158 + $0xb0] sm:$0xff]
      %v197 = vld [vmem:[%s158 + $0xb8] sm:$0xff]
      %v198 = vld [vmem:[%s158 + $0xc0] sm:$0xff]
      %v199 = vld [vmem:[%s158 + $0xc8] sm:$0xff]
      %v200 = vld [vmem:[%s158 + $0xd0] sm:$0xff]
      %v201 = vld [vmem:[%s158 + $0xd8] sm:$0xff]
      %v202 = vld [vmem:[%s158 + $0xe0] sm:$0xff]
      %v203 = vld [vmem:[%s158 + $0xe8] sm:$0xff]
      %v204 = vld [vmem:[%s158 + $0xf0] sm:$0xff]
      %v205 = vld [vmem:[%s158 + $0xf8] sm:$0xff]
      %v206 = vld [vmem:[%s158 + $0x100] sm:$0xff]
      %v207 = vld [vmem:[%s158 + $0x108] sm:$0xff]
      %v208 = vld [vmem:[%s158 + $0x110] sm:$0xff]
      %v209 = vld [vmem:[%s158 + $0x118] sm:$0xff]
      %v210 = vld [vmem:[%s158 + $0x120] sm:$0xff]
      %v211 = vld [vmem:[%s158 + $0x128] sm:$0xff]
      %v212 = vld [vmem:[%s158 + $0x130] sm:$0xff]
      %v213 = vld [vmem:[%s158 + $0x138] sm:$0xff]
      %v214 = vld [vmem:[%s158 + $0x140] sm:$0xff]
      %v215 = vld [vmem:[%s158 + $0x148] sm:$0xff]
      %v216 = vxor.u32 %v174, 2147483648
      %v217 = vxor.u32 %v175, 2147483648
      %v218 = vxor.u32 %v176, 2147483648
      %v219 = vxor.u32 %v177, 2147483648
      %v220 = vxor.u32 %v178, 2147483648
      %v221 = vxor.u32 %v179, 2147483648
      %v222 = vxor.u32 %v180, 2147483648
      %v223 = vxor.u32 %v181, 2147483648
      %v224 = vxor.u32 %v182, 2147483648
      %v225 = vxor.u32 %v183, 2147483648
      %v226 = vxor.u32 %v184, 2147483648
      %v227 = vxor.u32 %v185, 2147483648
      %v228 = vxor.u32 %v186, 2147483648
      %v229 = vxor.u32 %v187, 2147483648
      %v230 = vxor.u32 %v188, 2147483648
      %v231 = vxor.u32 %v189, 2147483648
      %v232 = vxor.u32 %v190, 2147483648
      %v233 = vxor.u32 %v191, 2147483648
      %v234 = vxor.u32 %v192, 2147483648
      %v235 = vxor.u32 %v193, 2147483648
      %v236 = vxor.u32 %v194, 2147483648
      %v237 = vxor.u32 %v195, 2147483648
      %v238 = vxor.u32 %v196, 2147483648
      %v239 = vxor.u32 %v197, 2147483648
      %v240 = vxor.u32 %v198, 2147483648
      %v241 = vxor.u32 %v199, 2147483648
      %v242 = vxor.u32 %v200, 2147483648
      %v243 = vxor.u32 %v201, 2147483648
      %v244 = vxor.u32 %v202, 2147483648
      %v245 = vxor.u32 %v203, 2147483648
      %v246 = vxor.u32 %v204, 2147483648
      %v247 = vxor.u32 %v205, 2147483648
      %v248 = vxor.u32 %v206, 2147483648
      %v249 = vxor.u32 %v207, 2147483648
      %v250 = vxor.u32 %v208, 2147483648
      %v251 = vxor.u32 %v209, 2147483648
      %v252 = vxor.u32 %v210, 2147483648
      %v253 = vxor.u32 %v211, 2147483648
      %v254 = vxor.u32 %v212, 2147483648
      %v255 = vxor.u32 %v213, 2147483648
      %v256 = vxor.u32 %v214, 2147483648
      %v257 = vxor.u32 %v215, 2147483648
      %v258 = vmul.f32 %v216, 1.442695
      %v259 = vpow.pop %v258
      %v260 = vmul.f32 %v217, 1.442695
      %v261 = vpow.pop %v260
      %v262 = vmul.f32 %v218, 1.442695
      %v263 = vpow.pop %v262
      %v264 = vmul.f32 %v219, 1.442695
      %v265 = vpow.pop %v264
      %v266 = vmul.f32 %v220, 1.442695
      %v267 = vpow.pop %v266
      %v268 = vmul.f32 %v221, 1.442695
      %v269 = vpow.pop %v268
      %v270 = vmul.f32 %v222, 1.442695
      %v271 = vpow.pop %v270
      %v272 = vmul.f32 %v223, 1.442695
      %v273 = vpow.pop %v272
      %v274 = vmul.f32 %v224, 1.442695
      %v275 = vpow.pop %v274
      %v276 = vmul.f32 %v225, 1.442695
      %v277 = vpow.pop %v276
      %v278 = vmul.f32 %v226, 1.442695
      %v279 = vpow.pop %v278
      %v280 = vmul.f32 %v227, 1.442695
      %v281 = vpow.pop %v280
      %v282 = vmul.f32 %v228, 1.442695
      %v283 = vpow.pop %v282
      %v284 = vmul.f32 %v229, 1.442695
      %v285 = vpow.pop %v284
      %v286 = vmul.f32 %v230, 1.442695
      %v287 = vpow.pop %v286
      %v288 = vmul.f32 %v231, 1.442695
      %v289 = vpow.pop %v288
      %v290 = vmul.f32 %v232, 1.442695
      %v291 = vpow.pop %v290
      %v292 = vmul.f32 %v233, 1.442695
      %v293 = vpow.pop %v292
      %v294 = vmul.f32 %v234, 1.442695
      %v295 = vpow.pop %v294
      %v296 = vmul.f32 %v235, 1.442695
      %v297 = vpow.pop %v296
      %v298 = vmul.f32 %v236, 1.442695
      %v299 = vpow.pop %v298
      %v300 = vmul.f32 %v237, 1.442695
      %v301 = vpow.pop %v300
      %v302 = vmul.f32 %v238, 1.442695
      %v303 = vpow.pop %v302
      %v304 = vmul.f32 %v239, 1.442695
      %v305 = vpow.pop %v304
      %v306 = vmul.f32 %v240, 1.442695
      %v307 = vpow.pop %v306
      %v308 = vmul.f32 %v241, 1.442695
      %v309 = vpow.pop %v308
      %v310 = vmul.f32 %v242, 1.442695
      %v311 = vpow.pop %v310
      %v312 = vmul.f32 %v243, 1.442695
      %v313 = vpow.pop %v312
      %v314 = vmul.f32 %v244, 1.442695
      %v315 = vpow.pop %v314
      %v316 = vmul.f32 %v245, 1.442695
      %v317 = vpow.pop %v316
      %v318 = vmul.f32 %v246, 1.442695
      %v319 = vpow.pop %v318
      %v320 = vmul.f32 %v247, 1.442695
      %v321 = vpow.pop %v320
      %v322 = vmul.f32 %v248, 1.442695
      %v323 = vpow.pop %v322
      %v324 = vmul.f32 %v249, 1.442695
      %v325 = vpow.pop %v324
      %v326 = vmul.f32 %v250, 1.442695
      %v327 = vpow.pop %v326
      %v328 = vmul.f32 %v251, 1.442695
      %v329 = vpow.pop %v328
      %v330 = vmul.f32 %v252, 1.442695
      %v331 = vpow.pop %v330
      %v332 = vmul.f32 %v253, 1.442695
      %v333 = vpow.pop %v332
      %v334 = vmul.f32 %v254, 1.442695
      %v335 = vpow.pop %v334
      %v336 = vmul.f32 %v255, 1.442695
      %v337 = vpow.pop %v336
      %v338 = vmul.f32 %v256, 1.442695
      %v339 = vpow.pop %v338
      %v340 = vmul.f32 %v257, 1.442695
      %v341 = vpow.pop %v340
      %v342 = vadd.f32 %v259, 1.0
      %v343 = vadd.f32 %v261, 1.0
      %v344 = vadd.f32 %v263, 1.0
      %v345 = vadd.f32 %v265, 1.0
      %v346 = vadd.f32 %v267, 1.0
      %v347 = vadd.f32 %v269, 1.0
      %v348 = vadd.f32 %v271, 1.0
      %v349 = vadd.f32 %v273, 1.0
      %v350 = vadd.f32 %v275, 1.0
      %v351 = vadd.f32 %v277, 1.0
      %v352 = vadd.f32 %v279, 1.0
      %v353 = vadd.f32 %v281, 1.0
      %v354 = vadd.f32 %v283, 1.0
      %v355 = vadd.f32 %v285, 1.0
      %v356 = vadd.f32 %v287, 1.0
      %v357 = vadd.f32 %v289, 1.0
      %v358 = vadd.f32 %v291, 1.0
      %v359 = vadd.f32 %v293, 1.0
      %v360 = vadd.f32 %v295, 1.0
      %v361 = vadd.f32 %v297, 1.0
      %v362 = vadd.f32 %v299, 1.0
      %v363 = vadd.f32 %v301, 1.0
      %v364 = vadd.f32 %v303, 1.0
      %v365 = vadd.f32 %v305, 1.0
      %v366 = vadd.f32 %v307, 1.0
      %v367 = vadd.f32 %v309, 1.0
      %v368 = vadd.f32 %v311, 1.0
      %v369 = vadd.f32 %v313, 1.0
      %v370 = vadd.f32 %v315, 1.0
      %v371 = vadd.f32 %v317, 1.0
      %v372 = vadd.f32 %v319, 1.0
      %v373 = vadd.f32 %v321, 1.0
      %v374 = vadd.f32 %v323, 1.0
      %v375 = vadd.f32 %v325, 1.0
      %v376 = vadd.f32 %v327, 1.0
      %v377 = vadd.f32 %v329, 1.0
      %v378 = vadd.f32 %v331, 1.0
      %v379 = vadd.f32 %v333, 1.0
      %v380 = vadd.f32 %v335, 1.0
      %v381 = vadd.f32 %v337, 1.0
      %v382 = vadd.f32 %v339, 1.0
      %v383 = vadd.f32 %v341, 1.0
      %v384 = vrcp.pop %v342
      %v385 = vmul.f32 1.0, %v384
      %v386 = vrcp.pop %v343
      %v387 = vmul.f32 1.0, %v386
      %v388 = vrcp.pop %v344
      %v389 = vmul.f32 1.0, %v388
      %v390 = vrcp.pop %v345
      %v391 = vmul.f32 1.0, %v390
      %v392 = vrcp.pop %v346
      %v393 = vmul.f32 1.0, %v392
      %v394 = vrcp.pop %v347
      %v395 = vmul.f32 1.0, %v394
      %v396 = vrcp.pop %v348
      %v397 = vmul.f32 1.0, %v396
      %v398 = vrcp.pop %v349
      %v399 = vmul.f32 1.0, %v398
      %v400 = vrcp.pop %v350
      %v401 = vmul.f32 1.0, %v400
      %v402 = vrcp.pop %v351
      %v403 = vmul.f32 1.0, %v402
      %v404 = vrcp.pop %v352
      %v405 = vmul.f32 1.0, %v404
      %v406 = vrcp.pop %v353
      %v407 = vmul.f32 1.0, %v406
      %v408 = vrcp.pop %v354
      %v409 = vmul.f32 1.0, %v408
      %v410 = vrcp.pop %v355
      %v411 = vmul.f32 1.0, %v410
      %v412 = vrcp.pop %v356
      %v413 = vmul.f32 1.0, %v412
      %v414 = vrcp.pop %v357
      %v415 = vmul.f32 1.0, %v414
      %v416 = vrcp.pop %v358
      %v417 = vmul.f32 1.0, %v416
      %v418 = vrcp.pop %v359
      %v419 = vmul.f32 1.0, %v418
      %v420 = vrcp.pop %v360
      %v421 = vmul.f32 1.0, %v420
      %v422 = vrcp.pop %v361
      %v423 = vmul.f32 1.0, %v422
      %v424 = vrcp.pop %v362
      %v425 = vmul.f32 1.0, %v424
      %v426 = vrcp.pop %v363
      %v427 = vmul.f32 1.0, %v426
      %v428 = vrcp.pop %v364
      %v429 = vmul.f32 1.0, %v428
      %v430 = vrcp.pop %v365
      %v431 = vmul.f32 1.0, %v430
      %v432 = vrcp.pop %v366
      %v433 = vmul.f32 1.0, %v432
      %v434 = vrcp.pop %v367
      %v435 = vmul.f32 1.0, %v434
      %v436 = vrcp.pop %v368
      %v437 = vmul.f32 1.0, %v436
      %v438 = vrcp.pop %v369
      %v439 = vmul.f32 1.0, %v438
      %v440 = vrcp.pop %v370
      %v441 = vmul.f32 1.0, %v440
      %v442 = vrcp.pop %v371
      %v443 = vmul.f32 1.0, %v442
      %v444 = vrcp.pop %v372
      %v445 = vmul.f32 1.0, %v444
      %v446 = vrcp.pop %v373
      %v447 = vmul.f32 1.0, %v446
      %v448 = vrcp.pop %v374
      %v449 = vmul.f32 1.0, %v448
      %v450 = vrcp.pop %v375
      %v451 = vmul.f32 1.0, %v450
      %v452 = vrcp.pop %v376
      %v453 = vmul.f32 1.0, %v452
      %v454 = vrcp.pop %v377
      %v455 = vmul.f32 1.0, %v454
      %v456 = vrcp.pop %v378
      %v457 = vmul.f32 1.0, %v456
      %v458 = vrcp.pop %v379
      %v459 = vmul.f32 1.0, %v458
      %v460 = vrcp.pop %v380
      %v461 = vmul.f32 1.0, %v460
      %v462 = vrcp.pop %v381
      %v463 = vmul.f32 1.0, %v462
      %v464 = vrcp.pop %v382
      %v465 = vmul.f32 1.0, %v464
      %v466 = vrcp.pop %v383
      %v467 = vmul.f32 1.0, %v466
      %v468 = vld [vmem:[%s165] sm:$0xff]
      %v469 = vld [vmem:[%s165 + $0x8] sm:$0xff]
      %v470 = vld [vmem:[%s165 + $0x10] sm:$0xff]
      %v471 = vld [vmem:[%s165 + $0x18] sm:$0xff]
      %v472 = vld [vmem:[%s165 + $0x20] sm:$0xff]
      %v473 = vld [vmem:[%s165 + $0x28] sm:$0xff]
      %v474 = vld [vmem:[%s165 + $0x30] sm:$0xff]
      %v475 = vld [vmem:[%s165 + $0x38] sm:$0xff]
      %v476 = vld [vmem:[%s165 + $0x40] sm:$0xff]
      %v477 = vld [vmem:[%s165 + $0x48] sm:$0xff]
      %v478 = vld [vmem:[%s165 + $0x50] sm:$0xff]
      %v479 = vld [vmem:[%s165 + $0x58] sm:$0xff]
      %v480 = vld [vmem:[%s165 + $0x60] sm:$0xff]
      %v481 = vld [vmem:[%s165 + $0x68] sm:$0xff]
      %v482 = vld [vmem:[%s165 + $0x70] sm:$0xff]
      %v483 = vld [vmem:[%s165 + $0x78] sm:$0xff]
      %v484 = vld [vmem:[%s165 + $0x80] sm:$0xff]
      %v485 = vld [vmem:[%s165 + $0x88] sm:$0xff]
      %v486 = vld [vmem:[%s165 + $0x90] sm:$0xff]
      %v487 = vld [vmem:[%s165 + $0x98] sm:$0xff]
      %v488 = vld [vmem:[%s165 + $0xa0] sm:$0xff]
      %v489 = vld [vmem:[%s165 + $0xa8] sm:$0xff]
      %v490 = vld [vmem:[%s165 + $0xb0] sm:$0xff]
      %v491 = vld [vmem:[%s165 + $0xb8] sm:$0xff]
      %v492 = vld [vmem:[%s165 + $0xc0] sm:$0xff]
      %v493 = vld [vmem:[%s165 + $0xc8] sm:$0xff]
      %v494 = vld [vmem:[%s165 + $0xd0] sm:$0xff]
      %v495 = vld [vmem:[%s165 + $0xd8] sm:$0xff]
      %v496 = vld [vmem:[%s165 + $0xe0] sm:$0xff]
      %v497 = vld [vmem:[%s165 + $0xe8] sm:$0xff]
      %v498 = vld [vmem:[%s165 + $0xf0] sm:$0xff]
      %v499 = vld [vmem:[%s165 + $0xf8] sm:$0xff]
      %v500 = vld [vmem:[%s165 + $0x100] sm:$0xff]
      %v501 = vld [vmem:[%s165 + $0x108] sm:$0xff]
      %v502 = vld [vmem:[%s165 + $0x110] sm:$0xff]
      %v503 = vld [vmem:[%s165 + $0x118] sm:$0xff]
      %v504 = vld [vmem:[%s165 + $0x120] sm:$0xff]
      %v505 = vld [vmem:[%s165 + $0x128] sm:$0xff]
      %v506 = vld [vmem:[%s165 + $0x130] sm:$0xff]
      %v507 = vld [vmem:[%s165 + $0x138] sm:$0xff]
      %v508 = vld [vmem:[%s165 + $0x140] sm:$0xff]
      %v509 = vld [vmem:[%s165 + $0x148] sm:$0xff]
      %v510 = vld [vmem:[%s165 + $0x150] sm:$0xff]
      %v511 = vld [vmem:[%s165 + $0x158] sm:$0xff]
      %v512 = vld [vmem:[%s165 + $0x160] sm:$0xff]
      %v513 = vld [vmem:[%s165 + $0x168] sm:$0xff]
      %v514 = vld [vmem:[%s165 + $0x170] sm:$0xff]
      %v515 = vld [vmem:[%s165 + $0x178] sm:$0xff]
      %v516 = vld [vmem:[%s165 + $0x180] sm:$0xff]
      %v517 = vld [vmem:[%s165 + $0x188] sm:$0xff]
      %v518 = vld [vmem:[%s165 + $0x190] sm:$0xff]
      %v519 = vld [vmem:[%s165 + $0x198] sm:$0xff]
      %v520 = vld [vmem:[%s165 + $0x1a0] sm:$0xff]
      %v521 = vld [vmem:[%s165 + $0x1a8] sm:$0xff]
      %v522 = vld [vmem:[%s165 + $0x1b0] sm:$0xff]
      %v523 = vld [vmem:[%s165 + $0x1b8] sm:$0xff]
      %v524 = vld [vmem:[%s165 + $0x1c0] sm:$0xff]
      %v525 = vld [vmem:[%s165 + $0x1c8] sm:$0xff]
      %v526 = vld [vmem:[%s165 + $0x1d0] sm:$0xff]
      %v527 = vld [vmem:[%s165 + $0x1d8] sm:$0xff]
      %v528 = vld [vmem:[%s165 + $0x1e0] sm:$0xff]
      %v529 = vld [vmem:[%s165 + $0x1e8] sm:$0xff]
      %v530 = vld [vmem:[%s165 + $0x1f0] sm:$0xff]
      %v531 = vld [vmem:[%s165 + $0x1f8] sm:$0xff]
      %v532 = vld [vmem:[%s165 + $0x200] sm:$0xff]
      %v533 = vld [vmem:[%s165 + $0x208] sm:$0xff]
      %v534 = vld [vmem:[%s165 + $0x210] sm:$0xff]
      %v535 = vld [vmem:[%s165 + $0x218] sm:$0xff]
      %v536 = vld [vmem:[%s165 + $0x220] sm:$0xff]
      %v537 = vld [vmem:[%s165 + $0x228] sm:$0xff]
      %v538 = vld [vmem:[%s165 + $0x230] sm:$0xff]
      %v539 = vld [vmem:[%s165 + $0x238] sm:$0xff]
      %v540 = vld [vmem:[%s165 + $0x240] sm:$0xff]
      %v541 = vld [vmem:[%s165 + $0x248] sm:$0xff]
      %v542 = vld [vmem:[%s165 + $0x250] sm:$0xff]
      %v543 = vld [vmem:[%s165 + $0x258] sm:$0xff]
      %v544 = vld [vmem:[%s165 + $0x260] sm:$0xff]
      %v545 = vld [vmem:[%s165 + $0x268] sm:$0xff]
      %v546 = vld [vmem:[%s165 + $0x270] sm:$0xff]
      %v547 = vld [vmem:[%s165 + $0x278] sm:$0xff]
      %v548 = vld [vmem:[%s165 + $0x280] sm:$0xff]
      %v549 = vld [vmem:[%s165 + $0x288] sm:$0xff]
      %v550 = vld [vmem:[%s165 + $0x290] sm:$0xff]
      %v551 = vld [vmem:[%s165 + $0x298] sm:$0xff]
      %553 = vset.pattern.permute.xlu0 0
      %554 = vperm.xlu0 %553, %v385
      %v555 = vpop.permute.xlu0 %554
      %558 = vset.pattern.permute.xlu0 0
      %559 = vperm.xlu0 %558, %v387
      %v560 = vpop.permute.xlu0 %559
      %563 = vset.pattern.permute.xlu0 0
      %564 = vperm.xlu0 %563, %v389
      %v565 = vpop.permute.xlu0 %564
      %568 = vset.pattern.permute.xlu0 0
      %569 = vperm.xlu0 %568, %v391
      %v570 = vpop.permute.xlu0 %569
      %573 = vset.pattern.permute.xlu0 0
      %574 = vperm.xlu0 %573, %v393
      %v575 = vpop.permute.xlu0 %574
      %578 = vset.pattern.permute.xlu0 0
      %579 = vperm.xlu0 %578, %v395
      %v580 = vpop.permute.xlu0 %579
      %583 = vset.pattern.permute.xlu0 0
      %584 = vperm.xlu0 %583, %v397
      %v585 = vpop.permute.xlu0 %584
      %588 = vset.pattern.permute.xlu0 0
      %589 = vperm.xlu0 %588, %v399
      %v590 = vpop.permute.xlu0 %589
      %593 = vset.pattern.permute.xlu0 0
      %594 = vperm.xlu0 %593, %v401
      %v595 = vpop.permute.xlu0 %594
      %598 = vset.pattern.permute.xlu0 0
      %599 = vperm.xlu0 %598, %v403
      %v600 = vpop.permute.xlu0 %599
      %603 = vset.pattern.permute.xlu0 0
      %604 = vperm.xlu0 %603, %v405
      %v605 = vpop.permute.xlu0 %604
      %608 = vset.pattern.permute.xlu0 0
      %609 = vperm.xlu0 %608, %v407
      %v610 = vpop.permute.xlu0 %609
      %613 = vset.pattern.permute.xlu0 0
      %614 = vperm.xlu0 %613, %v409
      %v615 = vpop.permute.xlu0 %614
      %618 = vset.pattern.permute.xlu0 0
      %619 = vperm.xlu0 %618, %v411
      %v620 = vpop.permute.xlu0 %619
      %623 = vset.pattern.permute.xlu0 0
      %624 = vperm.xlu0 %623, %v413
      %v625 = vpop.permute.xlu0 %624
      %628 = vset.pattern.permute.xlu0 0
      %629 = vperm.xlu0 %628, %v415
      %v630 = vpop.permute.xlu0 %629
      %633 = vset.pattern.permute.xlu0 0
      %634 = vperm.xlu0 %633, %v417
      %v635 = vpop.permute.xlu0 %634
      %638 = vset.pattern.permute.xlu0 0
      %639 = vperm.xlu0 %638, %v419
      %v640 = vpop.permute.xlu0 %639
      %643 = vset.pattern.permute.xlu0 0
      %644 = vperm.xlu0 %643, %v421
      %v645 = vpop.permute.xlu0 %644
      %648 = vset.pattern.permute.xlu0 0
      %649 = vperm.xlu0 %648, %v423
      %v650 = vpop.permute.xlu0 %649
      %653 = vset.pattern.permute.xlu0 0
      %654 = vperm.xlu0 %653, %v425
      %v655 = vpop.permute.xlu0 %654
      %658 = vset.pattern.permute.xlu0 0
      %659 = vperm.xlu0 %658, %v427
      %v660 = vpop.permute.xlu0 %659
      %663 = vset.pattern.permute.xlu0 0
      %664 = vperm.xlu0 %663, %v429
      %v665 = vpop.permute.xlu0 %664
      %668 = vset.pattern.permute.xlu0 0
      %669 = vperm.xlu0 %668, %v431
      %v670 = vpop.permute.xlu0 %669
      %673 = vset.pattern.permute.xlu0 0
      %674 = vperm.xlu0 %673, %v433
      %v675 = vpop.permute.xlu0 %674
      %678 = vset.pattern.permute.xlu0 0
      %679 = vperm.xlu0 %678, %v435
      %v680 = vpop.permute.xlu0 %679
      %683 = vset.pattern.permute.xlu0 0
      %684 = vperm.xlu0 %683, %v437
      %v685 = vpop.permute.xlu0 %684
      %688 = vset.pattern.permute.xlu0 0
      %689 = vperm.xlu0 %688, %v439
      %v690 = vpop.permute.xlu0 %689
      %693 = vset.pattern.permute.xlu0 0
      %694 = vperm.xlu0 %693, %v441
      %v695 = vpop.permute.xlu0 %694
      %698 = vset.pattern.permute.xlu0 0
      %699 = vperm.xlu0 %698, %v443
      %v700 = vpop.permute.xlu0 %699
      %703 = vset.pattern.permute.xlu0 0
      %704 = vperm.xlu0 %703, %v445
      %v705 = vpop.permute.xlu0 %704
      %708 = vset.pattern.permute.xlu0 0
      %709 = vperm.xlu0 %708, %v447
      %v710 = vpop.permute.xlu0 %709
      %713 = vset.pattern.permute.xlu0 0
      %714 = vperm.xlu0 %713, %v449
      %v715 = vpop.permute.xlu0 %714
      %718 = vset.pattern.permute.xlu0 0
      %719 = vperm.xlu0 %718, %v451
      %v720 = vpop.permute.xlu0 %719
      %723 = vset.pattern.permute.xlu0 0
      %724 = vperm.xlu0 %723, %v453
      %v725 = vpop.permute.xlu0 %724
      %728 = vset.pattern.permute.xlu0 0
      %729 = vperm.xlu0 %728, %v455
      %v730 = vpop.permute.xlu0 %729
      %733 = vset.pattern.permute.xlu0 0
      %734 = vperm.xlu0 %733, %v457
      %v735 = vpop.permute.xlu0 %734
      %738 = vset.pattern.permute.xlu0 0
      %739 = vperm.xlu0 %738, %v459
      %v740 = vpop.permute.xlu0 %739
      %743 = vset.pattern.permute.xlu0 0
      %744 = vperm.xlu0 %743, %v461
      %v745 = vpop.permute.xlu0 %744
      %748 = vset.pattern.permute.xlu0 0
      %749 = vperm.xlu0 %748, %v463
      %v750 = vpop.permute.xlu0 %749
      %753 = vset.pattern.permute.xlu0 0
      %754 = vperm.xlu0 %753, %v465
      %v755 = vpop.permute.xlu0 %754
      %758 = vset.pattern.permute.xlu0 0
      %759 = vperm.xlu0 %758, %v467
      %v760 = vpop.permute.xlu0 %759
      %v762 = vmul.f32 %v555, %v468
      %v763 = vmul.f32 %v555, %v469
      %v764 = vmul.f32 %v560, %v470
      %v765 = vmul.f32 %v560, %v471
      %v766 = vmul.f32 %v565, %v472
      %v767 = vmul.f32 %v565, %v473
      %v768 = vmul.f32 %v570, %v474
      %v769 = vmul.f32 %v570, %v475
      %v770 = vmul.f32 %v575, %v476
      %v771 = vmul.f32 %v575, %v477
      %v772 = vmul.f32 %v580, %v478
      %v773 = vmul.f32 %v580, %v479
      %v774 = vmul.f32 %v585, %v480
      %v775 = vmul.f32 %v585, %v481
      %v776 = vmul.f32 %v590, %v482
      %v777 = vmul.f32 %v590, %v483
      %v778 = vmul.f32 %v595, %v484
      %v779 = vmul.f32 %v595, %v485
      %v780 = vmul.f32 %v600, %v486
      %v781 = vmul.f32 %v600, %v487
      %v782 = vmul.f32 %v605, %v488
      %v783 = vmul.f32 %v605, %v489
      %v784 = vmul.f32 %v610, %v490
      %v785 = vmul.f32 %v610, %v491
      %v786 = vmul.f32 %v615, %v492
      %v787 = vmul.f32 %v615, %v493
      %v788 = vmul.f32 %v620, %v494
      %v789 = vmul.f32 %v620, %v495
      %v790 = vmul.f32 %v625, %v496
      %v791 = vmul.f32 %v625, %v497
      %v792 = vmul.f32 %v630, %v498
      %v793 = vmul.f32 %v630, %v499
      %v794 = vmul.f32 %v635, %v500
      %v795 = vmul.f32 %v635, %v501
      %v796 = vmul.f32 %v640, %v502
      %v797 = vmul.f32 %v640, %v503
      %v798 = vmul.f32 %v645, %v504
      %v799 = vmul.f32 %v645, %v505
      %v800 = vmul.f32 %v650, %v506
      %v801 = vmul.f32 %v650, %v507
      %v802 = vmul.f32 %v655, %v508
      %v803 = vmul.f32 %v655, %v509
      %v804 = vmul.f32 %v660, %v510
      %v805 = vmul.f32 %v660, %v511
      %v806 = vmul.f32 %v665, %v512
      %v807 = vmul.f32 %v665, %v513
      %v808 = vmul.f32 %v670, %v514
      %v809 = vmul.f32 %v670, %v515
      %v810 = vmul.f32 %v675, %v516
      %v811 = vmul.f32 %v675, %v517
      %v812 = vmul.f32 %v680, %v518
      %v813 = vmul.f32 %v680, %v519
      %v814 = vmul.f32 %v685, %v520
      %v815 = vmul.f32 %v685, %v521
      %v816 = vmul.f32 %v690, %v522
      %v817 = vmul.f32 %v690, %v523
      %v818 = vmul.f32 %v695, %v524
      %v819 = vmul.f32 %v695, %v525
      %v820 = vmul.f32 %v700, %v526
      %v821 = vmul.f32 %v700, %v527
      %v822 = vmul.f32 %v705, %v528
      %v823 = vmul.f32 %v705, %v529
      %v824 = vmul.f32 %v710, %v530
      %v825 = vmul.f32 %v710, %v531
      %v826 = vmul.f32 %v715, %v532
      %v827 = vmul.f32 %v715, %v533
      %v828 = vmul.f32 %v720, %v534
      %v829 = vmul.f32 %v720, %v535
      %v830 = vmul.f32 %v725, %v536
      %v831 = vmul.f32 %v725, %v537
      %v832 = vmul.f32 %v730, %v538
      %v833 = vmul.f32 %v730, %v539
      %v834 = vmul.f32 %v735, %v540
      %v835 = vmul.f32 %v735, %v541
      %v836 = vmul.f32 %v740, %v542
      %v837 = vmul.f32 %v740, %v543
      %v838 = vmul.f32 %v745, %v544
      %v839 = vmul.f32 %v745, %v545
      %v840 = vmul.f32 %v750, %v546
      %v841 = vmul.f32 %v750, %v547
      %v842 = vmul.f32 %v755, %v548
      %v843 = vmul.f32 %v755, %v549
      %v844 = vmul.f32 %v760, %v550
      %v845 = vmul.f32 %v760, %v551
      %846 = vst [vmem:[%s172] sm:$0xff] %v762
      %vm847 = vcmask 556032
      %848 = vst.msk [vmem:[%s172 + $0x8] sm:$0xff] %vm847, %v763
      %849 = vst [vmem:[%s172 + $0x10] sm:$0xff] %v764
      %850 = vst.msk [vmem:[%s172 + $0x18] sm:$0xff] %vm847, %v765
      %851 = vst [vmem:[%s172 + $0x20] sm:$0xff] %v766
      %852 = vst.msk [vmem:[%s172 + $0x28] sm:$0xff] %vm847, %v767
      %853 = vst [vmem:[%s172 + $0x30] sm:$0xff] %v768
      %854 = vst.msk [vmem:[%s172 + $0x38] sm:$0xff] %vm847, %v769
      %855 = vst [vmem:[%s172 + $0x40] sm:$0xff] %v770
      %856 = vst.msk [vmem:[%s172 + $0x48] sm:$0xff] %vm847, %v771
      %857 = vst [vmem:[%s172 + $0x50] sm:$0xff] %v772
      %858 = vst.msk [vmem:[%s172 + $0x58] sm:$0xff] %vm847, %v773
      %859 = vst [vmem:[%s172 + $0x60] sm:$0xff] %v774
      %860 = vst.msk [vmem:[%s172 + $0x68] sm:$0xff] %vm847, %v775
      %861 = vst [vmem:[%s172 + $0x70] sm:$0xff] %v776
      %862 = vst.msk [vmem:[%s172 + $0x78] sm:$0xff] %vm847, %v777
      %863 = vst [vmem:[%s172 + $0x80] sm:$0xff] %v778
      %864 = vst.msk [vmem:[%s172 + $0x88] sm:$0xff] %vm847, %v779
      %865 = vst [vmem:[%s172 + $0x90] sm:$0xff] %v780
      %866 = vst.msk [vmem:[%s172 + $0x98] sm:$0xff] %vm847, %v781
      %867 = vst [vmem:[%s172 + $0xa0] sm:$0xff] %v782
      %868 = vst.msk [vmem:[%s172 + $0xa8] sm:$0xff] %vm847, %v783
      %869 = vst [vmem:[%s172 + $0xb0] sm:$0xff] %v784
      %870 = vst.msk [vmem:[%s172 + $0xb8] sm:$0xff] %vm847, %v785
      %871 = vst [vmem:[%s172 + $0xc0] sm:$0xff] %v786
      %872 = vst.msk [vmem:[%s172 + $0xc8] sm:$0xff] %vm847, %v787
      %873 = vst [vmem:[%s172 + $0xd0] sm:$0xff] %v788
      %874 = vst.msk [vmem:[%s172 + $0xd8] sm:$0xff] %vm847, %v789
      %875 = vst [vmem:[%s172 + $0xe0] sm:$0xff] %v790
      %876 = vst.msk [vmem:[%s172 + $0xe8] sm:$0xff] %vm847, %v791
      %877 = vst [vmem:[%s172 + $0xf0] sm:$0xff] %v792
      %878 = vst.msk [vmem:[%s172 + $0xf8] sm:$0xff] %vm847, %v793
      %879 = vst [vmem:[%s172 + $0x100] sm:$0xff] %v794
      %880 = vst.msk [vmem:[%s172 + $0x108] sm:$0xff] %vm847, %v795
      %881 = vst [vmem:[%s172 + $0x110] sm:$0xff] %v796
      %882 = vst.msk [vmem:[%s172 + $0x118] sm:$0xff] %vm847, %v797
      %883 = vst [vmem:[%s172 + $0x120] sm:$0xff] %v798
      %884 = vst.msk [vmem:[%s172 + $0x128] sm:$0xff] %vm847, %v799
      %885 = vst [vmem:[%s172 + $0x130] sm:$0xff] %v800
      %886 = vst.msk [vmem:[%s172 + $0x138] sm:$0xff] %vm847, %v801
      %887 = vst [vmem:[%s172 + $0x140] sm:$0xff] %v802
      %888 = vst.msk [vmem:[%s172 + $0x148] sm:$0xff] %vm847, %v803
      %889 = vst [vmem:[%s172 + $0x150] sm:$0xff] %v804
      %890 = vst.msk [vmem:[%s172 + $0x158] sm:$0xff] %vm847, %v805
      %891 = vst [vmem:[%s172 + $0x160] sm:$0xff] %v806
      %892 = vst.msk [vmem:[%s172 + $0x168] sm:$0xff] %vm847, %v807
      %893 = vst [vmem:[%s172 + $0x170] sm:$0xff] %v808
      %894 = vst.msk [vmem:[%s172 + $0x178] sm:$0xff] %vm847, %v809
      %895 = vst [vmem:[%s172 + $0x180] sm:$0xff] %v810
      %896 = vst.msk [vmem:[%s172 + $0x188] sm:$0xff] %vm847, %v811
      %897 = vst [vmem:[%s172 + $0x190] sm:$0xff] %v812
      %898 = vst.msk [vmem:[%s172 + $0x198] sm:$0xff] %vm847, %v813
      %899 = vst [vmem:[%s172 + $0x1a0] sm:$0xff] %v814
      %900 = vst.msk [vmem:[%s172 + $0x1a8] sm:$0xff] %vm847, %v815
      %901 = vst [vmem:[%s172 + $0x1b0] sm:$0xff] %v816
      %902 = vst.msk [vmem:[%s172 + $0x1b8] sm:$0xff] %vm847, %v817
      %903 = vst [vmem:[%s172 + $0x1c0] sm:$0xff] %v818
      %904 = vst.msk [vmem:[%s172 + $0x1c8] sm:$0xff] %vm847, %v819
      %905 = vst [vmem:[%s172 + $0x1d0] sm:$0xff] %v820
      %906 = vst.msk [vmem:[%s172 + $0x1d8] sm:$0xff] %vm847, %v821
      %907 = vst [vmem:[%s172 + $0x1e0] sm:$0xff] %v822
      %908 = vst.msk [vmem:[%s172 + $0x1e8] sm:$0xff] %vm847, %v823
      %909 = vst [vmem:[%s172 + $0x1f0] sm:$0xff] %v824
      %910 = vst.msk [vmem:[%s172 + $0x1f8] sm:$0xff] %vm847, %v825
      %911 = vst [vmem:[%s172 + $0x200] sm:$0xff] %v826
      %912 = vst.msk [vmem:[%s172 + $0x208] sm:$0xff] %vm847, %v827
      %913 = vst [vmem:[%s172 + $0x210] sm:$0xff] %v828
      %914 = vst.msk [vmem:[%s172 + $0x218] sm:$0xff] %vm847, %v829
      %915 = vst [vmem:[%s172 + $0x220] sm:$0xff] %v830
      %916 = vst.msk [vmem:[%s172 + $0x228] sm:$0xff] %vm847, %v831
      %917 = vst [vmem:[%s172 + $0x230] sm:$0xff] %v832
      %918 = vst.msk [vmem:[%s172 + $0x238] sm:$0xff] %vm847, %v833
      %919 = vst [vmem:[%s172 + $0x240] sm:$0xff] %v834
      %920 = vst.msk [vmem:[%s172 + $0x248] sm:$0xff] %vm847, %v835
      %921 = vst [vmem:[%s172 + $0x250] sm:$0xff] %v836
      %922 = vst.msk [vmem:[%s172 + $0x258] sm:$0xff] %vm847, %v837
      %923 = vst [vmem:[%s172 + $0x260] sm:$0xff] %v838
      %924 = vst.msk [vmem:[%s172 + $0x268] sm:$0xff] %vm847, %v839
      %925 = vst [vmem:[%s172 + $0x270] sm:$0xff] %v840
      %926 = vst.msk [vmem:[%s172 + $0x278] sm:$0xff] %vm847, %v841
      %927 = vst [vmem:[%s172 + $0x280] sm:$0xff] %v842
      %928 = vst.msk [vmem:[%s172 + $0x288] sm:$0xff] %vm847, %v843
      %929 = vst [vmem:[%s172 + $0x290] sm:$0xff] %v844
      %930 = vst.msk [vmem:[%s172 + $0x298] sm:$0xff] %vm847, %v845
      %s931 = smul.u32 42, %s13
      %p932 = scmp.lt.s32.totalorder %s931, 83
      %s933 = scalar_select %p932, %s931, 83
      %s934 = smul.addr %s933, 2
      %s935 = smul.addr %s934, 8
      %s936 = scalar_lea.vmem %s2, %s935
      // Predicated region
      $region29: #{tpu_custom_call.1} parent=27 // pred_check
        %p937 = pneg %p83
      $region30: #{tpu_custom_call.1} parent=27 // pred_check_branch
        %939 = sbr.rel (%p937) target = $region32
      $region31: #{tpu_custom_call.1} parent=27 // pred_region
        %s940 = smul.u32 42, %s13
      $region32: #{tpu_custom_call.1} parent=27 // pred_fallthru
        _
    $region28: #{tpu_custom_call.1} parent=5 // pred_fallthru
      _
    %p941 = scmp.le.s32.totalorder 2, %s8
    // Predicated region
    $region33: #{tpu_custom_call.1} parent=5 // pred_check
      %p942 = pneg %p941
    $region34: #{tpu_custom_call.1} parent=5 // pred_check_branch
      %944 = sbr.rel (%p942) target = $region36
    $region35: #{tpu_custom_call.1} parent=5 // pred_region
      %s945 = ssub.s32 %s8, 2
      // Predicated region
      $region37: #{tpu_custom_call.1} parent=35 // pred_check
        %p946 = pneg %p89
      $region38: #{tpu_custom_call.1} parent=35 // pred_check_branch
        %948 = sbr.rel (%p946) target = $region40
      $region39: #{tpu_custom_call.1} parent=35 // pred_region
        %s949 = smul.u32 42, %s14
        %p950 = scmp.lt.s32.totalorder %s949, 83
        %s951 = scalar_select %p950, %s949, 83
        %s952 = smul.addr %s951, 2
        %s953 = smul.addr %s952, 8
        %s954 = scalar_lea.vmem %s2, %s953
      $region40: #{tpu_custom_call.1} parent=35 // pred_fallthru
        _
    $region36: #{tpu_custom_call.1} parent=5 // pred_fallthru
      _
  $region6: #{tpu_custom_call.1} parent=0 // loop_footer
    %s12 = sadd.s32 1, %s8
  $region7: #{tpu_custom_call.1} parent=0 // loop_footer_branch
    %7 = sbr.rel target = $region3
  $region8: #{tpu_custom_call.1} parent=0 // loop_exit
    _

</llo_original>
